<compile_context>
chip_gen: v7x
topology: tpu7x:2x2x1
jax: 0.10.0
libtpu: 0.0.40
codegen_flags: <defaults>
</compile_context>

<pallas_src>
import functools

import jax
import jax.numpy as jnp
from jax.experimental import pallas as pl
from jax.experimental.pallas import tpu as pltpu

IGNORE_INDEX = -100


# ----------------------------------------------------------------------------
# Pallas kernel: per-token masked cross-entropy with online-LSE vocab tiling
# ----------------------------------------------------------------------------
def _ce_kernel(labels_ref, logits_ref, out_ref, m_ref, l_ref, p_ref, *,
               bv, v_total, mask_cols):
    j = pl.program_id(1)                      # vocab-block index (reduction axis)

    @pl.when(j == 0)
    def _():
        m_ref[...] = jnp.full_like(m_ref, -jnp.inf)
        l_ref[...] = jnp.zeros_like(l_ref)
        p_ref[...] = jnp.zeros_like(p_ref)

    # Native-dtype tile comes over DMA; cast to f32 only inside VMEM.
    x = logits_ref[...].astype(jnp.float32)   # (bm, bv)
    labels = labels_ref[...]                  # (bm, 1) int32

    # Global vocab id of each lane in this block.
    col = jax.lax.broadcasted_iota(jnp.int32, x.shape, 1) + j * bv

    if mask_cols:
        # V not a multiple of bv: neutralize garbage columns of the last block.
        x_lse = jnp.where(col < v_total, x, -jnp.inf)
    else:
        x_lse = x

    # Online log-sum-exp update (flash-attention style).
    m_prev = m_ref[...]
    m_new = jnp.maximum(m_prev, jnp.max(x_lse, axis=-1, keepdims=True))
    e_sum = jnp.sum(jnp.exp(x_lse - m_new), axis=-1, keepdims=True)
    l_ref[...] = l_ref[...] * jnp.exp(m_prev - m_new) + e_sum
    m_ref[...] = m_new

    # Picked raw logit at the label (the label hits exactly one vocab block;
    # IGNORE_INDEX never matches, garbage columns never match).
    p_ref[...] = p_ref[...] + jnp.sum(jnp.where(col == labels, x, 0.0),
                                      axis=-1, keepdims=True)

    @pl.when(j == pl.num_programs(1) - 1)
    def _():
        valid = labels != IGNORE_INDEX        # masks ignore_index, the shifted
        #                                       last position and padded rows
        ce = m_ref[...] + jnp.log(l_ref[...]) - p_ref[...]
        out_ref[...] = jnp.where(valid, ce, 0.0)


# ----------------------------------------------------------------------------
# Tiling / VMEM budget, re-derived per TPU generation
# ----------------------------------------------------------------------------
def _vmem_limit_bytes():
    try:
        cap = pltpu.get_tpu_info().vmem_capacity_bytes
    except Exception:
        cap = 128 << 20
    if cap >= (96 << 20):
        return 64 << 20      # v5e / v6e: 128 MiB physical -> plenty of headroom
    return 36 << 20          # v7x: 64 MiB per TensorCore -> stay conservative


def _choose_tiles(n_rows, vocab, itemsize, vmem_limit):
    # Vocab tile: whole vocab when small, else 2K lanes (online-LSE handles the rest).
    if vocab <= 8192:
        bv, mask_cols = vocab, False
    else:
        bv, mask_cols = 2048, (vocab % 2048 != 0)
    # Row tile: multiple of native sublane packing; double-buffered input tile
    # plus ~3 f32 working tiles should fill about half the scoped VMEM limit.
    sub = {1: 32, 2: 16}.get(itemsize, 8)
    per_row_bytes = bv * (2 * itemsize + 3 * 4) + 64
    bm = (vmem_limit // 2) // per_row_bytes
    bm = max(sub, min(1024, (bm // sub) * sub))
    bm = min(bm, ((n_rows + sub - 1) // sub) * sub)
    return bm, bv, mask_cols


# ----------------------------------------------------------------------------
# Masked-mean token cross-entropy over causally-shifted labels
# ----------------------------------------------------------------------------
def _cross_entropy_mean(logits, labels, num_items_in_batch=None):
    b, t, v = logits.shape
    n = b * t
    vmem_limit = _vmem_limit_bytes()
    bm, bv, mask_cols = _choose_tiles(n, v, jnp.dtype(logits.dtype).itemsize,
                                      vmem_limit)
    n_pad = ((n + bm - 1) // bm) * bm
    nv = (v + bv - 1) // bv

    # Free collapse of leading contiguous dims -- no slice, no cast, no copy of
    # the big logits tensor; the causal shift lives on the tiny labels instead.
    logits2d = logits.reshape(n, v)

    # Shifted labels: position b*T + t holds labels[b, t+1]; the last position
    # of every row gets IGNORE_INDEX (the dropped shift_logits row).
    shift_labels = jnp.concatenate(
        [labels[:, 1:], jnp.full((b, 1), IGNORE_INDEX, labels.dtype)], axis=1
    ).reshape(-1).astype(jnp.int32)

    # Denominator: tiny XLA reduce in the wrapper (cnt output dropped from kernel).
    n_valid = jnp.sum(shift_labels != IGNORE_INDEX).astype(jnp.float32)

    pad = n_pad - n
    if pad:
        # Invariant: padded rows carry IGNORE_INDEX, so garbage logits rows read
        # past the array edge are masked before reaching the output.
        shift_labels = jnp.pad(shift_labels, ((0, pad),),
                               constant_values=IGNORE_INDEX)
    labels_col = shift_labels.reshape(n_pad, 1)

    kernel = functools.partial(_ce_kernel, bv=bv, v_total=v, mask_cols=mask_cols)

    per_tok = pl.pallas_call(
        kernel,
        out_shape=jax.ShapeDtypeStruct((n_pad, 1), jnp.float32),
        grid_spec=pltpu.PrefetchScalarGridSpec(
            num_scalar_prefetch=0,
            grid=(n_pad // bm, nv),
            in_specs=[
                pl.BlockSpec((bm, 1), lambda i, j: (i, 0)),
                pl.BlockSpec((bm, bv), lambda i, j: (i, j)),
            ],
            out_specs=pl.BlockSpec((bm, 1), lambda i, j: (i, 0)),
            scratch_shapes=[pltpu.VMEM((bm, 1), jnp.float32)] * 3,
        ),
        compiler_params=pltpu.CompilerParams(
            # Row axis "parallel" (each row block owns its output block, so the
            # two v7x TensorCores never share an accumulator); vocab axis is the
            # in-core reduction.
            dimension_semantics=("parallel", "arbitrary"),
            vmem_limit_bytes=vmem_limit,
        ),
    )(labels_col, logits2d)

    denom = (n_valid if num_items_in_batch is None
             else jnp.asarray(num_items_in_batch, jnp.float32))
    # Faithful to torch cross_entropy: all-ignored batch yields NaN (0/0).
    return jnp.sum(per_tok) / denom


# ----------------------------------------------------------------------------
# Glue: fixed-tag weight construction (integer pattern match, plain JAX)
# ----------------------------------------------------------------------------
def _apply_tag_weights(labels, weights, tag_ids, weight):
    """Set weights[i, j:j+L] = weight wherever labels[i, j:j+L] == tag_ids."""
    b, t = labels.shape
    tag = jnp.asarray(tag_ids, jnp.int32)
    L = tag.shape[0]
    if L > t:
        return weights
    match = jnp.ones((b, t - L + 1), bool)
    for k in range(L):
        match = match & (labels[:, k:t - L + 1 + k] == tag[k])
    cov = jnp.zeros((b, t), bool)
    for k in range(L):
        cov = cov.at[:, k:t - L + 1 + k].set(cov[:, k:t - L + 1 + k] | match)
    return jnp.where(cov, jnp.float32(weight), weights)


# ----------------------------------------------------------------------------
# FixedTagLoss forward
# ----------------------------------------------------------------------------
@functools.partial(jax.jit, static_argnames=("fixed_tags_ids",
                                             "allowed_token_ids",
                                             "fixed_tag_weight",
                                             "allowed_token_weight"))
def fixed_tag_loss(logits, labels, *, fixed_tags_ids, allowed_token_ids,
                   fixed_tag_weight=2.0, allowed_token_weight=1.0,
                   num_items_in_batch=None):
    # weights over the *unshifted* labels, exactly like the torch module.
    weights = jnp.ones(labels.shape, jnp.float32)
    if fixed_tag_weight > 1.0:
        for tag in fixed_tags_ids:
            weights = _apply_tag_weights(labels, weights, tag, fixed_tag_weight)
    if allowed_token_ids and allowed_token_weight > 1.0:
        for tok in allowed_token_ids:
            weights = _apply_tag_weights(labels, weights, (tok,),
                                         allowed_token_weight)

    # ForCausalLMLoss: mean over valid tokens (or sum / num_items_in_batch).
    ce = _cross_entropy_mean(logits, labels, num_items_in_batch)

    # weighted_loss = ce * weights.view(-1); loss = weighted_loss.mean()
    return ce * jnp.mean(weights)


# ----------------------------------------------------------------------------
if __name__ == "__main__":
    key = jax.random.PRNGKey(0)
    B, T, V = 2, 8, 128  # small shapes; vocab on the lane dim

    k_logits, k_labels = jax.random.split(key)
    # Native bf16 logits: no wrapper-side f32 cast -> halved DMA volume.
    logits = jax.random.normal(k_logits, (B, T, V), jnp.bfloat16)
    labels = jax.random.randint(k_labels, (B, T), 0, V, jnp.int32)

    # Synthetic "tokenizer" output: deterministic fixed-tag / color token ids.
    fixed_tags_ids = ((5, 6, 7), (10, 11))          # two fixed tags
    allowed_token_ids = tuple(range(20, 30))        # 10 color tokens

    # Plant the tags so the weighting path actually triggers, and add one
    # ignore_index to exercise the CE mask.
    labels = labels.at[0, 2:5].set(jnp.array([5, 6, 7], jnp.int32))
    labels = labels.at[1, 4:6].set(jnp.array([10, 11], jnp.int32))
    labels = labels.at[1, 0].set(IGNORE_INDEX)

    loss = fixed_tag_loss(
        logits, labels,
        fixed_tags_ids=fixed_tags_ids,
        allowed_token_ids=allowed_token_ids,
        fixed_tag_weight=2.0,
        allowed_token_weight=1.0,
    )
    jax.block_until_ready(loss)
    assert loss.shape == () and jnp.isfinite(loss)
    print("KERNEL_OK")
</pallas_src>

<mosaic_0001>
module attributes {stable_mosaic.version = 11 : i64} {
  func.func @_ce_kernel(%arg0: i32, %arg1: i32, %arg2: memref<16x1xi32, #tpu.memory_space<vmem>>, %arg3: memref<16x128xbf16, #tpu.memory_space<vmem>>, %arg4: memref<16x1xf32, #tpu.memory_space<vmem>>, %arg5: memref<16x1xf32, #tpu.memory_space<vmem>>, %arg6: memref<16x1xf32, #tpu.memory_space<vmem>>, %arg7: memref<16x1xf32, #tpu.memory_space<vmem>>) attributes {dimension_semantics = [#tpu.dimension_semantics<parallel>, #tpu.dimension_semantics<arbitrary>], iteration_bounds = array<i64: 1, 1>, scalar_prefetch = 0 : i64, scratch_operands = 3 : i64, tpu.core_type = #tpu.core_type<tc>, window_params = [{transform_indices = @transform_0, window_bounds = array<i64: 16, 1>}, {transform_indices = @transform_1, window_bounds = array<i64: 16, 128>}, {transform_indices = @transform_2, window_bounds = array<i64: 16, 1>}]} {
    %c0_i32 = arith.constant 0 : i32
    %0 = arith.cmpi eq, %arg1, %c0_i32 : i32
    %1 = arith.extui %0 : i1 to i32
    %c0_i32_0 = arith.constant 0 : i32
    %2 = arith.cmpi ne, %1, %c0_i32_0 : i32
    scf.if %2 {
      %cst_21 = arith.constant 0xFF800000 : f32
      %38 = vector.broadcast %cst_21 : f32 to vector<16x1xf32>
      %c0_22 = arith.constant 0 : index
      %c0_23 = arith.constant 0 : index
      %39 = vector.load %arg5[%c0_22, %c0_23] : memref<16x1xf32, #tpu.memory_space<vmem>>, vector<16x1xf32>
      tpu.vector_store %arg5[%c0_22, %c0_23], %38 {strides = array<i32>} : memref<16x1xf32, #tpu.memory_space<vmem>>, vector<16x1xf32>,
      %cst_24 = arith.constant 0.000000e+00 : f32
      %40 = vector.broadcast %cst_24 : f32 to vector<16x1xf32>
      %c0_25 = arith.constant 0 : index
      %c0_26 = arith.constant 0 : index
      %41 = vector.load %arg6[%c0_25, %c0_26] : memref<16x1xf32, #tpu.memory_space<vmem>>, vector<16x1xf32>
      tpu.vector_store %arg6[%c0_25, %c0_26], %40 {strides = array<i32>} : memref<16x1xf32, #tpu.memory_space<vmem>>, vector<16x1xf32>,
      %cst_27 = arith.constant 0.000000e+00 : f32
      %42 = vector.broadcast %cst_27 : f32 to vector<16x1xf32>
      %c0_28 = arith.constant 0 : index
      %c0_29 = arith.constant 0 : index
      %43 = vector.load %arg7[%c0_28, %c0_29] : memref<16x1xf32, #tpu.memory_space<vmem>>, vector<16x1xf32>
      tpu.vector_store %arg7[%c0_28, %c0_29], %42 {strides = array<i32>} : memref<16x1xf32, #tpu.memory_space<vmem>>, vector<16x1xf32>,
    } else {
    }
    %c0 = arith.constant 0 : index
    %c0_1 = arith.constant 0 : index
    %3 = vector.load %arg3[%c0, %c0_1] : memref<16x128xbf16, #tpu.memory_space<vmem>>, vector<16x128xbf16>
    %4 = arith.extf %3 : vector<16x128xbf16> to vector<16x128xf32>
    %c0_2 = arith.constant 0 : index
    %c0_3 = arith.constant 0 : index
    %5 = vector.load %arg2[%c0_2, %c0_3] : memref<16x1xi32, #tpu.memory_space<vmem>>, vector<16x1xi32>
    %6 = tpu.iota {dimensions = array<i32: 1>} : vector<16x128xi32>
    %c128_i32 = arith.constant 128 : i32
    %7 = arith.muli %arg1, %c128_i32 : i32
    %8 = vector.broadcast %7 : i32 to vector<16x128xi32>
    %9 = arith.addi %6, %8 : vector<16x128xi32>
    %c0_4 = arith.constant 0 : index
    %c0_5 = arith.constant 0 : index
    %10 = vector.load %arg5[%c0_4, %c0_5] : memref<16x1xf32, #tpu.memory_space<vmem>>, vector<16x1xf32>
    %cst = arith.constant dense<0xFF800000> : vector<16xf32>
    %11 = vector.multi_reduction <maximumf>, %4, %cst [1] : vector<16x128xf32> to vector<16xf32>
    %12 = vector.shape_cast %11 : vector<16xf32> to vector<16x1xf32>
    %13 = arith.maximumf %10, %12 : vector<16x1xf32>
    %14 = vector.broadcast %13 : vector<16x1xf32> to vector<16x128xf32>
    %15 = arith.subf %4, %14 : vector<16x128xf32>
    %16 = math.exp %15 : vector<16x128xf32>
    %cst_6 = arith.constant dense<0.000000e+00> : vector<16xf32>
    %17 = vector.multi_reduction <add>, %16, %cst_6 [1] : vector<16x128xf32> to vector<16xf32>
    %18 = vector.shape_cast %17 : vector<16xf32> to vector<16x1xf32>
    %c0_7 = arith.constant 0 : index
    %c0_8 = arith.constant 0 : index
    %19 = vector.load %arg6[%c0_7, %c0_8] : memref<16x1xf32, #tpu.memory_space<vmem>>, vector<16x1xf32>
    %20 = arith.subf %10, %13 : vector<16x1xf32>
    %21 = math.exp %20 : vector<16x1xf32>
    %22 = arith.mulf %19, %21 : vector<16x1xf32>
    %23 = arith.addf %22, %18 : vector<16x1xf32>
    %c0_9 = arith.constant 0 : index
    %c0_10 = arith.constant 0 : index
    %24 = vector.load %arg6[%c0_9, %c0_10] : memref<16x1xf32, #tpu.memory_space<vmem>>, vector<16x1xf32>
    tpu.vector_store %arg6[%c0_9, %c0_10], %23 {strides = array<i32>} : memref<16x1xf32, #tpu.memory_space<vmem>>, vector<16x1xf32>,
    %c0_11 = arith.constant 0 : index
    %c0_12 = arith.constant 0 : index
    %25 = vector.load %arg5[%c0_11, %c0_12] : memref<16x1xf32, #tpu.memory_space<vmem>>, vector<16x1xf32>
    tpu.vector_store %arg5[%c0_11, %c0_12], %13 {strides = array<i32>} : memref<16x1xf32, #tpu.memory_space<vmem>>, vector<16x1xf32>,
    %c0_13 = arith.constant 0 : index
    %c0_14 = arith.constant 0 : index
    %26 = vector.load %arg7[%c0_13, %c0_14] : memref<16x1xf32, #tpu.memory_space<vmem>>, vector<16x1xf32>
    %27 = vector.broadcast %5 : vector<16x1xi32> to vector<16x128xi32>
    %28 = arith.cmpi eq, %9, %27 : vector<16x128xi32>
    %cst_15 = arith.constant 0.000000e+00 : f32
    %29 = vector.broadcast %cst_15 : f32 to vector<16x128xf32>
    %30 = arith.select %28, %4, %29 : vector<16x128xi1>, vector<16x128xf32>
    %cst_16 = arith.constant dense<0.000000e+00> : vector<16xf32>
    %31 = vector.multi_reduction <add>, %30, %cst_16 [1] : vector<16x128xf32> to vector<16xf32>
    %32 = vector.shape_cast %31 : vector<16xf32> to vector<16x1xf32>
    %33 = arith.addf %26, %32 : vector<16x1xf32>
    %c0_17 = arith.constant 0 : index
    %c0_18 = arith.constant 0 : index
    %34 = vector.load %arg7[%c0_17, %c0_18] : memref<16x1xf32, #tpu.memory_space<vmem>>, vector<16x1xf32>
    tpu.vector_store %arg7[%c0_17, %c0_18], %33 {strides = array<i32>} : memref<16x1xf32, #tpu.memory_space<vmem>>, vector<16x1xf32>,
    %c0_i32_19 = arith.constant 0 : i32
    %35 = arith.cmpi eq, %arg1, %c0_i32_19 : i32
    %36 = arith.extui %35 : i1 to i32
    %c0_i32_20 = arith.constant 0 : i32
    %37 = arith.cmpi ne, %36, %c0_i32_20 : i32
    scf.if %37 {
      %c-100_i32 = arith.constant -100 : i32
      %38 = vector.broadcast %c-100_i32 : i32 to vector<16x1xi32>
      %39 = arith.cmpi ne, %5, %38 : vector<16x1xi32>
      %c0_21 = arith.constant 0 : index
      %c0_22 = arith.constant 0 : index
      %40 = vector.load %arg5[%c0_21, %c0_22] : memref<16x1xf32, #tpu.memory_space<vmem>>, vector<16x1xf32>
      %c0_23 = arith.constant 0 : index
      %c0_24 = arith.constant 0 : index
      %41 = vector.load %arg6[%c0_23, %c0_24] : memref<16x1xf32, #tpu.memory_space<vmem>>, vector<16x1xf32>
      %42 = math.log %41 : vector<16x1xf32>
      %43 = arith.addf %40, %42 : vector<16x1xf32>
      %c0_25 = arith.constant 0 : index
      %c0_26 = arith.constant 0 : index
      %44 = vector.load %arg7[%c0_25, %c0_26] : memref<16x1xf32, #tpu.memory_space<vmem>>, vector<16x1xf32>
      %45 = arith.subf %43, %44 : vector<16x1xf32>
      %cst_27 = arith.constant 0.000000e+00 : f32
      %46 = vector.broadcast %cst_27 : f32 to vector<16x1xf32>
      %47 = arith.select %39, %45, %46 : vector<16x1xi1>, vector<16x1xf32>
      %c0_28 = arith.constant 0 : index
      %c0_29 = arith.constant 0 : index
      %48 = vector.load %arg4[%c0_28, %c0_29] : memref<16x1xf32, #tpu.memory_space<vmem>>, vector<16x1xf32>
      tpu.vector_store %arg4[%c0_28, %c0_29], %47 {strides = array<i32>} : memref<16x1xf32, #tpu.memory_space<vmem>>, vector<16x1xf32>,
    } else {
    }
    return
  }
  func.func @transform_0(%arg0: i32, %arg1: i32) -> (i32, i32) {
    %c0_i32 = arith.constant 0 : i32
    %c0_i32_0 = arith.constant 0 : i32
    return %arg0, %c0_i32 : i32, i32
  }
  func.func @transform_1(%arg0: i32, %arg1: i32) -> (i32, i32) {
    %c0_i32 = arith.constant 0 : i32
    return %arg0, %arg1 : i32, i32
  }
  func.func @transform_2(%arg0: i32, %arg1: i32) -> (i32, i32) {
    %c0_i32 = arith.constant 0 : i32
    %c0_i32_0 = arith.constant 0 : i32
    return %arg0, %c0_i32 : i32, i32
  }
}

</mosaic_0001>

<llo_original>
// kernel: fixed_tag_loss.1
$region0: #{fixed_tag_loss.1}
  #allocation0 [shape = 'u32[]', space=smem, size = 0x4, offset = 0x4, fixed_abs, tag = 'smem constant byte address 0x4 - core index']
  #allocation1 [shape = 'u32[144,128]{1,0:T(1,128)}', space=vmem, size = 0x12000, scoped, tag = 'internal scratch']
  #allocation2 [shape = 'f32[16,1]{1,0:T(8,128)}', space=vmem, size = 0x2000, scoped, tag = 'scratch operand']
  #allocation3 [shape = 'f32[16,1]{1,0:T(8,128)}', space=vmem, size = 0x2000, scoped, tag = 'scratch operand']
  #allocation4 [shape = 'f32[16,1]{1,0:T(8,128)}', space=vmem, size = 0x2000, scoped, tag = 'scratch operand']
  %s0 = inlined_call_operand.hbm [shape: s32[16,1], index: 0, kind: input, shape index: {}]
  %s1 = inlined_call_operand.hbm [shape: bf16[16,128], index: 1, kind: input, shape index: {}]
  %s2 = inlined_call_operand.hbm [shape: f32[16,1], index: 2, kind: output, shape index: {}]
  %s3 = sld [smem:[#allocation0]]
  $region34: #{fixed_tag_loss.1} parent=0
    _
  %s5 = ssub.s32 1, %s3
  %s6 = scalar_select 0, %s5, %s3
  $region1: #{fixed_tag_loss.1} parent=0
    #allocation5 [shape = 'u8[8192]{0}', space=vmem, size = 0x2000, scoped, tag = 'input window, operand 0, single buffered']
    #allocation6 [shape = 's32[1]{0}', space=sflag, size = 0x4, scoped, tag = 'scoped memory for fixed_tag_loss.1']
    #allocation7 [shape = 's32[1]{0}', space=sflag, size = 0x4, scoped, tag = 'scoped memory for fixed_tag_loss.1']
    #allocation8 [shape = 'u8[4096]{0}', space=vmem, size = 0x1000, scoped, tag = 'input window, operand 1, single buffered']
    #allocation9 [shape = 's32[1]{0}', space=sflag, size = 0x4, scoped, tag = 'scoped memory for fixed_tag_loss.1']
    #allocation10 [shape = 'u8[8192]{0}', space=vmem, size = 0x2000, scoped, tag = 'output window, operand 0, single buffered']
    %7 = vsyncpa [#allocation6], 0
    %8 = vsyncpa [#allocation9], 0
    %9 = vsyncpa [#allocation7], 0
    // Predicated region
    $region2: #{fixed_tag_loss.1} parent=1 // pred_check
      _
    $region3: #{fixed_tag_loss.1} parent=1 // pred_check_branch
      %11 = sbr.rel (0) target = $region5
    $region4: #{fixed_tag_loss.1} parent=1 // pred_region
      %s13 = ssub.s32 256, 256
      %14 = vsyncadd [#allocation6], %s13
      %s15 = sshll.u32 [#allocation5], 4
      %s16 = int_to_ptr.vmem [resolvable:$true] %s15
      %21 = dma.hbm_to_vmem [thread:$0]  %s0, 256, %s16, [#allocation6], 128, 128, 8
    $region5: #{fixed_tag_loss.1} parent=1 // pred_fallthru
      _
    // Predicated region
    $region6: #{fixed_tag_loss.1} parent=1 // pred_check
      _
    $region7: #{fixed_tag_loss.1} parent=1 // pred_check_branch
      %23 = sbr.rel (0) target = $region9
    $region8: #{fixed_tag_loss.1} parent=1 // pred_region
      %s25 = ssub.s32 128, 128
      %26 = vsyncadd [#allocation9], %s25
      %s27 = sshll.u32 [#allocation8], 4
      %s28 = int_to_ptr.vmem [resolvable:$true] %s27
      %33 = dma.hbm_to_vmem [thread:$0]  %s1, 128, %s28, [#allocation9], 64, 64, 4
    $region9: #{fixed_tag_loss.1} parent=1 // pred_fallthru
      _
    // Predicated region
    $region10: #{fixed_tag_loss.1} parent=1 // pred_check
      _
    $region11: #{fixed_tag_loss.1} parent=1 // pred_check_branch
      %35 = sbr.rel (0) target = $region13
    $region12: #{fixed_tag_loss.1} parent=1 // pred_region
      %36 = dma.done [#allocation6], 256
    $region13: #{fixed_tag_loss.1} parent=1 // pred_fallthru
      _
    // Predicated region
    $region14: #{fixed_tag_loss.1} parent=1 // pred_check
      _
    $region15: #{fixed_tag_loss.1} parent=1 // pred_check_branch
      %38 = sbr.rel (0) target = $region17
    $region16: #{fixed_tag_loss.1} parent=1 // pred_region
      %39 = dma.done [#allocation9], 128
    $region17: #{fixed_tag_loss.1} parent=1 // pred_fallthru
      _
    %p40 = scmp.eq.s32.totalorder 0, 0
    // Predicated region
    $region18: #{fixed_tag_loss.1} parent=1 // pred_check
      %p41 = pneg %p40
    $region19: #{fixed_tag_loss.1} parent=1 // pred_check_branch
      %43 = sbr.rel (%p41) target = $region21
    $region20: #{fixed_tag_loss.1} parent=1 // pred_region
      %vm44 = vcmask 7168
      %45 = vst.msk [vmem:[#allocation2] sm:$0xff] %vm44, -inf
      %46 = vst.msk [vmem:[#allocation2 + $0x8] sm:$0xff] %vm44, -inf
      %47 = vst.msk [vmem:[#allocation3] sm:$0xff] %vm44, 0.0
      %48 = vst.msk [vmem:[#allocation3 + $0x8] sm:$0xff] %vm44, 0.0
      %49 = vst.msk [vmem:[#allocation4] sm:$0xff] %vm44, 0.0
      %50 = vst.msk [vmem:[#allocation4 + $0x8] sm:$0xff] %vm44, 0.0
    $region21: #{fixed_tag_loss.1} parent=1 // pred_fallthru
      _
    %v51 = vld [vmem:[#allocation8] sm:$0xf]
    %v52 = vld [vmem:[#allocation8 + $0x4] sm:$0xf]
    %v53 = vunpack.c.l.bf16 %v51
    %v54 = vunpack.c.l.bf16 %v52
    %v55 = vld [vmem:[#allocation5] sm:$0xff]
    %v56 = vld [vmem:[#allocation5 + $0x8] sm:$0xff]
    %v57 = vlaneseq
    %v58 = vand.u32 %v57, 127
    %s59 = smul.u32 0, 128
    %v60 = vstv %s59
    %v61 = vadd.s32 %v58, %v60
    %v62 = vld [vmem:[#allocation2] sm:$0xff]
    %v63 = vld [vmem:[#allocation2 + $0x8] sm:$0xff]
    %64 = vmax.xlane.f32.xlu0 %v53
    %v65 = vpop.xlane.xlu0 %64
    %66 = vmax.xlane.f32.xlu0 %v54
    %v67 = vpop.xlane.xlu0 %66
    %v68 = vmax.f32 %v62, %v65
    %v69 = vmax.f32 %v63, %v67
    %71 = vset.pattern.permute.xlu0 0
    %72 = vperm.xlu0 %71, %v68
    %v73 = vpop.permute.xlu0 %72
    %76 = vset.pattern.permute.xlu0 0
    %77 = vperm.xlu0 %76, %v69
    %v78 = vpop.permute.xlu0 %77
    %v80 = vsub.f32 %v53, %v73
    %v81 = vsub.f32 %v54, %v78
    %v82 = vmul.f32 %v80, 1.442695
    %v83 = vpow.pop %v82
    %v84 = vmul.f32 %v81, 1.442695
    %v85 = vpow.pop %v84
    %86 = vadd.xlane.f32.xlu0 %v83
    %v87 = vpop.xlane.xlu0 %86
    %88 = vadd.xlane.f32.xlu0 %v85
    %v89 = vpop.xlane.xlu0 %88
    %v90 = vld [vmem:[#allocation3] sm:$0xff]
    %v91 = vld [vmem:[#allocation3 + $0x8] sm:$0xff]
    %v92 = vsub.f32 %v62, %v68
    %v93 = vsub.f32 %v63, %v69
    %v94 = vmul.f32 %v92, 1.442695
    %v95 = vpow.pop %v94
    %v96 = vmul.f32 %v93, 1.442695
    %v97 = vpow.pop %v96
    %v98 = vmul.f32 %v90, %v95
    %v99 = vmul.f32 %v91, %v97
    %v100 = vadd.f32 %v98, %v87
    %v101 = vadd.f32 %v99, %v89
    %vm102 = vcmask 7168
    %103 = vst.msk [vmem:[#allocation3] sm:$0xff] %vm102, %v100
    %104 = vst.msk [vmem:[#allocation3 + $0x8] sm:$0xff] %vm102, %v101
    %105 = vst.msk [vmem:[#allocation2] sm:$0xff] %vm102, %v68
    %106 = vst.msk [vmem:[#allocation2 + $0x8] sm:$0xff] %vm102, %v69
    %v107 = vld [vmem:[#allocation4] sm:$0xff]
    %v108 = vld [vmem:[#allocation4 + $0x8] sm:$0xff]
    %109 = vset.pattern.permute.xlu0 0
    %110 = vperm.xlu0 %109, %v55
    %v111 = vpop.permute.xlu0 %110
    %112 = vset.pattern.permute.xlu0 0
    %113 = vperm.xlu0 %112, %v56
    %v114 = vpop.permute.xlu0 %113
    %vm115 = vcmp.eq.s32.totalorder %v61, %v111
    %vm116 = vcmp.eq.s32.totalorder %v61, %v114
    %v117 = vsel %vm115, %v53, 0.0
    %v118 = vsel %vm116, %v54, 0.0
    %119 = vadd.xlane.f32.xlu0 %v117
    %v120 = vpop.xlane.xlu0 %119
    %121 = vadd.xlane.f32.xlu0 %v118
    %v122 = vpop.xlane.xlu0 %121
    %v123 = vadd.f32 %v107, %v120
    %v124 = vadd.f32 %v108, %v122
    %125 = vst.msk [vmem:[#allocation4] sm:$0xff] %vm102, %v123
    %126 = vst.msk [vmem:[#allocation4 + $0x8] sm:$0xff] %vm102, %v124
    // Predicated region
    $region22: #{fixed_tag_loss.1} parent=1 // pred_check
      %p127 = pneg %p40
    $region23: #{fixed_tag_loss.1} parent=1 // pred_check_branch
      %129 = sbr.rel (%p127) target = $region25
    $region24: #{fixed_tag_loss.1} parent=1 // pred_region
      %vm130 = vcmp.ne.s32.totalorder %v55, 4294967196
      %vm131 = vcmp.ne.s32.totalorder %v56, 4294967196
      %v132 = vld [vmem:[#allocation2] sm:$0xff]
      %v133 = vld [vmem:[#allocation2 + $0x8] sm:$0xff]
      %v134 = vld [vmem:[#allocation3] sm:$0xff]
      %v135 = vld [vmem:[#allocation3 + $0x8] sm:$0xff]
      %v136 = vlog2.pop %v134
      %v137 = vmul.f32 %v136, 0.6931472
      %v138 = vlog2.pop %v135
      %v139 = vmul.f32 %v138, 0.6931472
      %v140 = vadd.f32 %v132, %v137
      %v141 = vadd.f32 %v133, %v139
      %v142 = vld [vmem:[#allocation4] sm:$0xff]
      %v143 = vld [vmem:[#allocation4 + $0x8] sm:$0xff]
      %v144 = vsub.f32 %v140, %v142
      %v145 = vsub.f32 %v141, %v143
      %v146 = vsel %vm130, %v144, 0.0
      %v147 = vsel %vm131, %v145, 0.0
      %148 = vst.msk [vmem:[#allocation10] sm:$0xff] %vm102, %v146
      %149 = vst.msk [vmem:[#allocation10 + $0x8] sm:$0xff] %vm102, %v147
    $region25: #{fixed_tag_loss.1} parent=1 // pred_fallthru
      _
    // Predicated region
    $region26: #{fixed_tag_loss.1} parent=1 // pred_check
      _
    $region27: #{fixed_tag_loss.1} parent=1 // pred_check_branch
      %151 = sbr.rel (0) target = $region29
    $region28: #{fixed_tag_loss.1} parent=1 // pred_region
      %s153 = ssub.s32 256, 256
      %154 = vsyncadd [#allocation7], %s153
      %s155 = sshll.u32 [#allocation10], 4
      %s156 = int_to_ptr.vmem [resolvable:$true] %s155
      %161 = dma.vmem_to_hbm [thread:$0]  %s156, 256, %s2, [#allocation7], 128, 128, 8
    $region29: #{fixed_tag_loss.1} parent=1 // pred_fallthru
      _
    // Predicated region
    $region30: #{fixed_tag_loss.1} parent=1 // pred_check
      _
    $region31: #{fixed_tag_loss.1} parent=1 // pred_check_branch
      %163 = sbr.rel (0) target = $region33
    $region32: #{fixed_tag_loss.1} parent=1 // pred_region
      %164 = dma.done [#allocation7], 256
    $region33: #{fixed_tag_loss.1} parent=1 // pred_fallthru
      _
    %165 = vsyncpa [#allocation6], 1
    %166 = vsyncpa [#allocation9], 1
    %167 = vsyncpa [#allocation7], 1

</llo_original>
